<compile_context>
chip_gen: v7x
topology: tpu7x:2x2x1
jax: 0.10.0
libtpu: 0.0.40
codegen_flags: <defaults>
</compile_context>

<pallas_src>
import functools
import math

import jax
import jax.numpy as jnp
from jax.experimental import pallas as pl
from jax.experimental.pallas import tpu as pltpu


def _round_up(a: int, b: int) -> int:
    return (a + b - 1) // b * b


def _vmem_capacity_bytes() -> int:
    """Generation-aware VMEM capacity query with a conservative fallback."""
    try:
        info = pltpu.get_tpu_info()
        cap = getattr(info, "vmem_capacity_bytes", None)
        if cap:
            return int(cap)
    except Exception:
        pass
    return 64 * 1024 * 1024  # safe for every current generation


def _pick_tv(v_pad: int, desired: int) -> int:
    """Largest lane-dense (multiple of 128) tile <= desired dividing v_pad."""
    desired = max(128, min(desired, v_pad))
    t = (desired // 128) * 128
    while t > 128 and v_pad % t != 0:
        t -= 128
    return t


def _est_vmem_bytes(tm: int, tv: int, d_model: int) -> int:
    """Rough double-buffered working-set estimate for pass 1."""
    return (2 * tm * d_model * 2      # x tile, bf16 (double buffered)
            + 2 * d_model * tv * 2    # weight tile, bf16
            + 2 * tv * 4              # bias tile, f32
            + 2 * tm * tv * 4         # streamed logits output tile, f32
            + 2 * tm * 4              # lse output block, f32
            + 2 * tm * 4)             # m / l scratch, f32


def _proj_logits_kernel(x_ref, w_ref, b_ref, logits_ref, lse_ref,
                        m_ref, l_ref, *, v_real=None):
    """One (row-tile, vocab-tile) grid step of pass 1.

    x_ref:      (tm, d_model) bf16, resident across the vocab axis
    w_ref:      (d_model, tv) bf16, streamed over the vocab axis
    b_ref:      (1, tv)       f32
    logits_ref: (tm, tv)      f32, streamed output block (raw logits)
    lse_ref:    (tm, 1)       f32, resident across the vocab axis
    m_ref/l_ref:(tm, 1)       f32 scratch -- running max / running sum-exp
    """
    j = pl.program_id(1)
    nv = pl.num_programs(1)
    tv = w_ref.shape[1]

    @pl.when(j == 0)
    def _init():
        m_ref[...] = jnp.full_like(m_ref, -jnp.inf)
        l_ref[...] = jnp.zeros_like(l_ref)

    # bf16 operands on the MXU, f32 accumulation; bias added in f32.
    logits = jnp.dot(x_ref[...], w_ref[...],
                     preferred_element_type=jnp.float32) + b_ref[...]

    # Mask padded vocab columns (only traced in when vocab % 128 != 0).
    if v_real is not None:
        col = j * tv + jax.lax.broadcasted_iota(jnp.int32, logits.shape, 1)
        logits = jnp.where(col < v_real, logits, -1e30)

    # Streamed, lane-dense store of this vocab tile's raw logits.
    logits_ref[...] = logits

    # Online log-sum-exp update (all f32).
    m_prev = m_ref[...]
    m_new = jnp.maximum(m_prev, jnp.max(logits, axis=-1, keepdims=True))
    l_ref[...] = (l_ref[...] * jnp.exp(m_prev - m_new)
                  + jnp.sum(jnp.exp(logits - m_new), axis=-1, keepdims=True))
    m_ref[...] = m_new

    # Finalize on the last vocab step: emit the global log-sum-exp.
    @pl.when(j == nv - 1)
    def _finalize():
        lse_ref[...] = m_ref[...] + jnp.log(l_ref[...])


def _lse_sub_kernel(logits_ref, lse_ref, o_ref):
    """Pass 2: log_prob = logits - lse (cheap streamed elementwise pass)."""
    o_ref[...] = (logits_ref[...] - lse_ref[...]).astype(o_ref.dtype)


def projection_layer(x, weight_t, bias, *, tm=512, tv=512, out_dtype=None):
    """log_softmax(x @ weight_t + bias, axis=-1).

    x:        (batch, seq, d_model)
    weight_t: (d_model, vocab)   (PyTorch Linear weight, transposed).
              Pass it already in bf16 to avoid a full-weight cast per call.
    bias:     (vocab,)
    out_dtype: defaults to x.dtype; pass jnp.bfloat16 to halve the final
               HBM writeback if the consumer tolerates it.
    """
    batch, seq, d_model = x.shape
    vocab = weight_t.shape[1]
    out_dtype = x.dtype if out_dtype is None else out_dtype

    M = batch * seq
    V_pad = _round_up(vocab, 128)          # pad vocab by < 128 cols at most

    # Row tile: large (arithmetic intensity ~tm FLOP per streamed weight
    # byte), multiple of 16 for bf16 sublane packing, clamped to problem size.
    tm = max(16, min(_round_up(tm, 16), _round_up(M, 16)))
    # Vocab tile: lane-dense multiple of 128 that divides the padded vocab.
    tv = _pick_tv(V_pad, tv)

    # Generation-aware VMEM budget (~54 MiB on v7x, ~100+ MiB on v5e/v6e).
    budget = int(_vmem_capacity_bytes() * 0.80)
    while _est_vmem_bytes(tm, tv, d_model) > budget and tm > 16:
        tm = max(16, (tm // 2 // 16) * 16)
    while _est_vmem_bytes(tm, tv, d_model) > budget and tv > 128:
        tv = _pick_tv(V_pad, tv // 2)

    M_pad = _round_up(M, tm)
    nm = M_pad // tm
    nv = V_pad // tv

    # bf16 MXU operands (halves HBM traffic for x; weight is cast only if the
    # caller didn't already provide bf16).
    x2d = x.reshape(M, d_model).astype(jnp.bfloat16)
    if M_pad != M:
        x2d = jnp.pad(x2d, ((0, M_pad - M), (0, 0)))

    w = weight_t if weight_t.dtype == jnp.bfloat16 else weight_t.astype(jnp.bfloat16)
    b2d = bias.reshape(1, vocab).astype(jnp.float32)
    if V_pad != vocab:
        # At most 127 padded columns; correctness handled by in-kernel mask.
        w = jnp.pad(w, ((0, 0), (0, V_pad - vocab)))
        b2d = jnp.pad(b2d, ((0, 0), (0, V_pad - vocab)))

    v_real = vocab if V_pad != vocab else None
    kernel = functools.partial(_proj_logits_kernel, v_real=v_real)

    # ---- Pass 1: streamed raw logits + (M, 1) log-sum-exp ----
    logits, lse = pl.pallas_call(
        kernel,
        out_shape=(jax.ShapeDtypeStruct((M_pad, V_pad), jnp.float32),
                   jax.ShapeDtypeStruct((M_pad, 1), jnp.float32)),
        grid_spec=pltpu.PrefetchScalarGridSpec(
            num_scalar_prefetch=0,
            grid=(nm, nv),
            in_specs=[
                # x tile: index constant in j -> resident across the vocab
                # sweep (no re-DMA per vocab step).
                pl.BlockSpec((tm, d_model), lambda i, j: (i, 0)),
                # weight / bias tiles: streamed over the vocab axis.
                pl.BlockSpec((d_model, tv), lambda i, j: (0, j)),
                pl.BlockSpec((1, tv), lambda i, j: (0, j)),
            ],
            out_specs=[
                # Streamed logits blocks: VMEM use independent of vocab size.
                pl.BlockSpec((tm, tv), lambda i, j: (i, j)),
                # Tiny lse block, resident across the vocab axis.
                pl.BlockSpec((tm, 1), lambda i, j: (i, 0)),
            ],
            scratch_shapes=[
                pltpu.VMEM((tm, 1), jnp.float32),  # running max
                pltpu.VMEM((tm, 1), jnp.float32),  # running sum-exp
            ],
        ),
        compiler_params=pltpu.CompilerParams(
            dimension_semantics=("parallel", "arbitrary"),
            vmem_limit_bytes=budget,
        ),
    )(x2d, w, b2d)

    # ---- Pass 2: cheap streamed lse subtraction + output cast ----
    out = pl.pallas_call(
        _lse_sub_kernel,
        out_shape=jax.ShapeDtypeStruct((M_pad, V_pad), out_dtype),
        grid_spec=pltpu.PrefetchScalarGridSpec(
            num_scalar_prefetch=0,
            grid=(nm, nv),
            in_specs=[
                pl.BlockSpec((tm, tv), lambda i, j: (i, j)),
                pl.BlockSpec((tm, 1), lambda i, j: (i, 0)),
            ],
            out_specs=pl.BlockSpec((tm, tv), lambda i, j: (i, j)),
        ),
        compiler_params=pltpu.CompilerParams(
            dimension_semantics=("parallel", "parallel"),
            vmem_limit_bytes=budget,
        ),
    )(logits, lse)

    return out[:M, :vocab].reshape(batch, seq, vocab)


if __name__ == "__main__":
    # Small shapes consistent with the module's forward.
    batch, seq, d_model, vocab = 2, 8, 32, 128

    key = jax.random.PRNGKey(0)
    kx, kw, kb = jax.random.split(key, 3)

    x = jax.random.normal(kx, (batch, seq, d_model), dtype=jnp.float32)
    bound = 1.0 / math.sqrt(d_model)
    weight_t = jax.random.uniform(kw, (d_model, vocab), jnp.float32,
                                  minval=-bound, maxval=bound)
    bias = jax.random.uniform(kb, (vocab,), jnp.float32,
                              minval=-bound, maxval=bound)

    proj = jax.jit(projection_layer)
    out = jax.block_until_ready(proj(x, weight_t, bias))
    assert out.shape == (batch, seq, vocab)

    # Tight check against a reference that applies the same bf16 operand
    # rounding the kernel uses (f32 accumulation, f32 softmax math).
    xb = x.astype(jnp.bfloat16).astype(jnp.float32)
    wb = weight_t.astype(jnp.bfloat16).astype(jnp.float32)
    ref_bf16 = jax.nn.log_softmax(
        xb.reshape(-1, d_model) @ wb + bias, axis=-1).reshape(batch, seq, vocab)
    assert jnp.allclose(out, ref_bf16, atol=2e-4, rtol=2e-4), float(
        jnp.max(jnp.abs(out - ref_bf16)))

    # Loose check against the full-f32 reference (bf16 operand rounding only).
    ref_f32 = jax.nn.log_softmax(x @ weight_t + bias, axis=-1)
    assert jnp.allclose(out, ref_f32, atol=5e-2, rtol=5e-2)

    print("KERNEL_OK")
</pallas_src>

<mosaic_0001>
module attributes {stable_mosaic.version = 11 : i64} {
  func.func @_lse_sub_kernel(%arg0: i32, %arg1: i32, %arg2: memref<16x128xf32, #tpu.memory_space<vmem>>, %arg3: memref<16x1xf32, #tpu.memory_space<vmem>>, %arg4: memref<16x128xf32, #tpu.memory_space<vmem>>) attributes {dimension_semantics = [#tpu.dimension_semantics<parallel>, #tpu.dimension_semantics<parallel>], iteration_bounds = array<i64: 1, 1>, scalar_prefetch = 0 : i64, scratch_operands = 0 : i64, tpu.core_type = #tpu.core_type<tc>, window_params = [{transform_indices = @transform_0, window_bounds = array<i64: 16, 128>}, {transform_indices = @transform_1, window_bounds = array<i64: 16, 1>}, {transform_indices = @transform_2, window_bounds = array<i64: 16, 128>}]} {
    %c0 = arith.constant 0 : index
    %c0_0 = arith.constant 0 : index
    %0 = vector.load %arg2[%c0, %c0_0] : memref<16x128xf32, #tpu.memory_space<vmem>>, vector<16x128xf32>
    %c0_1 = arith.constant 0 : index
    %c0_2 = arith.constant 0 : index
    %1 = vector.load %arg3[%c0_1, %c0_2] : memref<16x1xf32, #tpu.memory_space<vmem>>, vector<16x1xf32>
    %2 = vector.broadcast %1 : vector<16x1xf32> to vector<16x128xf32>
    %3 = arith.subf %0, %2 : vector<16x128xf32>
    %c0_3 = arith.constant 0 : index
    %c0_4 = arith.constant 0 : index
    %4 = vector.load %arg4[%c0_3, %c0_4] : memref<16x128xf32, #tpu.memory_space<vmem>>, vector<16x128xf32>
    tpu.vector_store %arg4[%c0_3, %c0_4], %3 {strides = array<i32>} : memref<16x128xf32, #tpu.memory_space<vmem>>, vector<16x128xf32>,
    return
  }
  func.func @transform_0(%arg0: i32, %arg1: i32) -> (i32, i32) {
    %c0_i32 = arith.constant 0 : i32
    return %arg0, %arg1 : i32, i32
  }
  func.func @transform_1(%arg0: i32, %arg1: i32) -> (i32, i32) {
    %c0_i32 = arith.constant 0 : i32
    %c0_i32_0 = arith.constant 0 : i32
    return %arg0, %c0_i32 : i32, i32
  }
  func.func @transform_2(%arg0: i32, %arg1: i32) -> (i32, i32) {
    %c0_i32 = arith.constant 0 : i32
    return %arg0, %arg1 : i32, i32
  }
}

module attributes {stable_mosaic.version = 11 : i64} {
  func.func @_proj_logits_kernel(%arg0: i32, %arg1: i32, %arg2: memref<16x32xbf16, #tpu.memory_space<vmem>>, %arg3: memref<32x128xbf16, #tpu.memory_space<vmem>>, %arg4: memref<1x128xf32, #tpu.memory_space<vmem>>, %arg5: memref<16x128xf32, #tpu.memory_space<vmem>>, %arg6: memref<16x1xf32, #tpu.memory_space<vmem>>, %arg7: memref<16x1xf32, #tpu.memory_space<vmem>>, %arg8: memref<16x1xf32, #tpu.memory_space<vmem>>) attributes {dimension_semantics = [#tpu.dimension_semantics<parallel>, #tpu.dimension_semantics<arbitrary>], iteration_bounds = array<i64: 1, 1>, scalar_prefetch = 0 : i64, scratch_operands = 2 : i64, tpu.core_type = #tpu.core_type<tc>, window_params = [{transform_indices = @transform_0, window_bounds = array<i64: 16, 32>}, {transform_indices = @transform_1, window_bounds = array<i64: 32, 128>}, {transform_indices = @transform_2, window_bounds = array<i64: 1, 128>}, {transform_indices = @transform_3, window_bounds = array<i64: 16, 128>}, {transform_indices = @transform_4, window_bounds = array<i64: 16, 1>}]} {
    %c0_i32 = arith.constant 0 : i32
    %0 = arith.cmpi eq, %arg1, %c0_i32 : i32
    %1 = arith.extui %0 : i1 to i32
    %c0_i32_0 = arith.constant 0 : i32
    %2 = arith.cmpi ne, %1, %c0_i32_0 : i32
    scf.if %2 {
      %cst_20 = arith.constant 0xFF800000 : f32
      %29 = vector.broadcast %cst_20 : f32 to vector<16x1xf32>
      %c0_21 = arith.constant 0 : index
      %c0_22 = arith.constant 0 : index
      %30 = vector.load %arg7[%c0_21, %c0_22] : memref<16x1xf32, #tpu.memory_space<vmem>>, vector<16x1xf32>
      tpu.vector_store %arg7[%c0_21, %c0_22], %29 {strides = array<i32>} : memref<16x1xf32, #tpu.memory_space<vmem>>, vector<16x1xf32>,
      %cst_23 = arith.constant 0.000000e+00 : f32
      %31 = vector.broadcast %cst_23 : f32 to vector<16x1xf32>
      %c0_24 = arith.constant 0 : index
      %c0_25 = arith.constant 0 : index
      %32 = vector.load %arg8[%c0_24, %c0_25] : memref<16x1xf32, #tpu.memory_space<vmem>>, vector<16x1xf32>
      tpu.vector_store %arg8[%c0_24, %c0_25], %31 {strides = array<i32>} : memref<16x1xf32, #tpu.memory_space<vmem>>, vector<16x1xf32>,
    } else {
    }
    %c0 = arith.constant 0 : index
    %c0_1 = arith.constant 0 : index
    %3 = vector.load %arg2[%c0, %c0_1] : memref<16x32xbf16, #tpu.memory_space<vmem>>, vector<16x32xbf16>
    %c0_2 = arith.constant 0 : index
    %c0_3 = arith.constant 0 : index
    %4 = vector.load %arg3[%c0_2, %c0_3] : memref<32x128xbf16, #tpu.memory_space<vmem>>, vector<32x128xbf16>
    %cst = arith.constant dense<0.000000e+00> : vector<16x128xf32>
    %5 = tpu.matmul %3, %4, %cst {dimension_numbers = #tpu.dot_dimension_numbers<[1], [0], [0], [1], [0, 0, 1, 1], [], []>} : vector<16x32xbf16>, vector<32x128xbf16>, vector<16x128xf32> -> vector<16x128xf32>
    %c0_4 = arith.constant 0 : index
    %c0_5 = arith.constant 0 : index
    %6 = vector.load %arg4[%c0_4, %c0_5] : memref<1x128xf32, #tpu.memory_space<vmem>>, vector<1x128xf32>
    %7 = vector.broadcast %6 : vector<1x128xf32> to vector<16x128xf32>
    %8 = arith.addf %5, %7 : vector<16x128xf32>
    %c0_6 = arith.constant 0 : index
    %c0_7 = arith.constant 0 : index
    %9 = vector.load %arg5[%c0_6, %c0_7] : memref<16x128xf32, #tpu.memory_space<vmem>>, vector<16x128xf32>
    tpu.vector_store %arg5[%c0_6, %c0_7], %8 {strides = array<i32>} : memref<16x128xf32, #tpu.memory_space<vmem>>, vector<16x128xf32>,
    %c0_8 = arith.constant 0 : index
    %c0_9 = arith.constant 0 : index
    %10 = vector.load %arg7[%c0_8, %c0_9] : memref<16x1xf32, #tpu.memory_space<vmem>>, vector<16x1xf32>
    %cst_10 = arith.constant dense<0xFF800000> : vector<16xf32>
    %11 = vector.multi_reduction <maximumf>, %8, %cst_10 [1] : vector<16x128xf32> to vector<16xf32>
    %12 = vector.shape_cast %11 : vector<16xf32> to vector<16x1xf32>
    %13 = arith.maximumf %10, %12 : vector<16x1xf32>
    %c0_11 = arith.constant 0 : index
    %c0_12 = arith.constant 0 : index
    %14 = vector.load %arg8[%c0_11, %c0_12] : memref<16x1xf32, #tpu.memory_space<vmem>>, vector<16x1xf32>
    %15 = arith.subf %10, %13 : vector<16x1xf32>
    %16 = math.exp %15 : vector<16x1xf32>
    %17 = arith.mulf %14, %16 : vector<16x1xf32>
    %18 = vector.broadcast %13 : vector<16x1xf32> to vector<16x128xf32>
    %19 = arith.subf %8, %18 : vector<16x128xf32>
    %20 = math.exp %19 : vector<16x128xf32>
    %cst_13 = arith.constant dense<0.000000e+00> : vector<16xf32>
    %21 = vector.multi_reduction <add>, %20, %cst_13 [1] : vector<16x128xf32> to vector<16xf32>
    %22 = vector.shape_cast %21 : vector<16xf32> to vector<16x1xf32>
    %23 = arith.addf %17, %22 : vector<16x1xf32>
    %c0_14 = arith.constant 0 : index
    %c0_15 = arith.constant 0 : index
    %24 = vector.load %arg8[%c0_14, %c0_15] : memref<16x1xf32, #tpu.memory_space<vmem>>, vector<16x1xf32>
    tpu.vector_store %arg8[%c0_14, %c0_15], %23 {strides = array<i32>} : memref<16x1xf32, #tpu.memory_space<vmem>>, vector<16x1xf32>,
    %c0_16 = arith.constant 0 : index
    %c0_17 = arith.constant 0 : index
    %25 = vector.load %arg7[%c0_16, %c0_17] : memref<16x1xf32, #tpu.memory_space<vmem>>, vector<16x1xf32>
    tpu.vector_store %arg7[%c0_16, %c0_17], %13 {strides = array<i32>} : memref<16x1xf32, #tpu.memory_space<vmem>>, vector<16x1xf32>,
    %c0_i32_18 = arith.constant 0 : i32
    %26 = arith.cmpi eq, %arg1, %c0_i32_18 : i32
    %27 = arith.extui %26 : i1 to i32
    %c0_i32_19 = arith.constant 0 : i32
    %28 = arith.cmpi ne, %27, %c0_i32_19 : i32
    scf.if %28 {
      %c0_20 = arith.constant 0 : index
      %c0_21 = arith.constant 0 : index
      %29 = vector.load %arg7[%c0_20, %c0_21] : memref<16x1xf32, #tpu.memory_space<vmem>>, vector<16x1xf32>
      %c0_22 = arith.constant 0 : index
      %c0_23 = arith.constant 0 : index
      %30 = vector.load %arg8[%c0_22, %c0_23] : memref<16x1xf32, #tpu.memory_space<vmem>>, vector<16x1xf32>
      %31 = math.log %30 : vector<16x1xf32>
      %32 = arith.addf %29, %31 : vector<16x1xf32>
      %c0_24 = arith.constant 0 : index
      %c0_25 = arith.constant 0 : index
      %33 = vector.load %arg6[%c0_24, %c0_25] : memref<16x1xf32, #tpu.memory_space<vmem>>, vector<16x1xf32>
      tpu.vector_store %arg6[%c0_24, %c0_25], %32 {strides = array<i32>} : memref<16x1xf32, #tpu.memory_space<vmem>>, vector<16x1xf32>,
    } else {
    }
    return
  }
  func.func @transform_0(%arg0: i32, %arg1: i32) -> (i32, i32) {
    %c0_i32 = arith.constant 0 : i32
    %c0_i32_0 = arith.constant 0 : i32
    return %arg0, %c0_i32 : i32, i32
  }
  func.func @transform_1(%arg0: i32, %arg1: i32) -> (i32, i32) {
    %c0_i32 = arith.constant 0 : i32
    %c0_i32_0 = arith.constant 0 : i32
    return %c0_i32, %arg1 : i32, i32
  }
  func.func @transform_2(%arg0: i32, %arg1: i32) -> (i32, i32) {
    %c0_i32 = arith.constant 0 : i32
    %c0_i32_0 = arith.constant 0 : i32
    return %c0_i32, %arg1 : i32, i32
  }
  func.func @transform_3(%arg0: i32, %arg1: i32) -> (i32, i32) {
    %c0_i32 = arith.constant 0 : i32
    return %arg0, %arg1 : i32, i32
  }
  func.func @transform_4(%arg0: i32, %arg1: i32) -> (i32, i32) {
    %c0_i32 = arith.constant 0 : i32
    %c0_i32_0 = arith.constant 0 : i32
    return %arg0, %c0_i32 : i32, i32
  }
}

</mosaic_0001>

<llo_original>
// kernel: projection_layer.3
$region0: #{projection_layer.3}
  #allocation0 [shape = 'u32[]', space=smem, size = 0x4, offset = 0x4, fixed_abs, tag = 'smem constant byte address 0x4 - core index']
  #allocation1 [shape = 'u32[144,128]{1,0:T(1,128)}', space=vmem, size = 0x12000, scoped, tag = 'internal scratch']
  %s0 = inlined_call_operand.vmem [shape: f32[16,128], index: 0, kind: input, shape index: {}]
  %s1 = inlined_call_operand.vmem [shape: f32[16,1], index: 1, kind: input, shape index: {}]
  %s2 = inlined_call_operand.hbm [shape: f32[16,128], index: 2, kind: output, shape index: {}]
  %s3 = sld [smem:[#allocation0]]
  $region18: #{projection_layer.3} parent=0
    _
  %s5 = ssub.s32 1, %s3
  %s6 = scalar_select 0, %s5, %s3
  $region1: #{projection_layer.3} parent=0
    #allocation2 [shape = 'u8[8192]{0}', space=vmem, size = 0x2000, scoped, tag = 'output window, operand 0, single buffered']
    #allocation3 [shape = 's32[1]{0}', space=sflag, size = 0x4, scoped, tag = 'scoped memory for projection_layer.3']
    %7 = vsyncpa [#allocation3], 0
    // Predicated region
    $region2: #{projection_layer.3} parent=1 // pred_check
      _
    $region3: #{projection_layer.3} parent=1 // pred_check_branch
      %9 = sbr.rel (0) target = $region5
    $region4: #{projection_layer.3} parent=1 // pred_region
      _
    $region5: #{projection_layer.3} parent=1 // pred_fallthru
      _
    // Predicated region
    $region6: #{projection_layer.3} parent=1 // pred_check
      _
    $region7: #{projection_layer.3} parent=1 // pred_check_branch
      %11 = sbr.rel (0) target = $region9
    $region8: #{projection_layer.3} parent=1 // pred_region
      _
    $region9: #{projection_layer.3} parent=1 // pred_fallthru
      _
    %v12 = vld [vmem:[%s0] sm:$0xff]
    %v13 = vld [vmem:[%s0 + $0x8] sm:$0xff]
    %v14 = vld [vmem:[%s1] sm:$0xff]
    %v15 = vld [vmem:[%s1 + $0x8] sm:$0xff]
    %17 = vset.pattern.permute.xlu0 0
    %18 = vperm.xlu0 %17, %v14
    %v19 = vpop.permute.xlu0 %18
    %22 = vset.pattern.permute.xlu0 0
    %23 = vperm.xlu0 %22, %v15
    %v24 = vpop.permute.xlu0 %23
    %v26 = vsub.f32 %v12, %v19
    %v27 = vsub.f32 %v13, %v24
    %28 = vst [vmem:[#allocation2] sm:$0xff] %v26
    %29 = vst [vmem:[#allocation2 + $0x8] sm:$0xff] %v27
    // Predicated region
    $region10: #{projection_layer.3} parent=1 // pred_check
      _
    $region11: #{projection_layer.3} parent=1 // pred_check_branch
      %31 = sbr.rel (0) target = $region13
    $region12: #{projection_layer.3} parent=1 // pred_region
      %s33 = ssub.s32 256, 256
      %34 = vsyncadd [#allocation3], %s33
      %s35 = sshll.u32 [#allocation2], 4
      %s36 = int_to_ptr.vmem [resolvable:$true] %s35
      %41 = dma.vmem_to_hbm [thread:$0]  %s36, 256, %s2, [#allocation3], 128, 128, 8
    $region13: #{projection_layer.3} parent=1 // pred_fallthru
      _
    // Predicated region
    $region14: #{projection_layer.3} parent=1 // pred_check
      _
    $region15: #{projection_layer.3} parent=1 // pred_check_branch
      %43 = sbr.rel (0) target = $region17
    $region16: #{projection_layer.3} parent=1 // pred_region
      %44 = dma.done [#allocation3], 256
    $region17: #{projection_layer.3} parent=1 // pred_fallthru
      _
    %45 = vsyncpa [#allocation3], 1

// kernel: projection_layer.2
$region0: #{projection_layer.2}
  #allocation0 [shape = 'u32[]', space=smem, size = 0x4, offset = 0x4, fixed_abs, tag = 'smem constant byte address 0x4 - core index']
  #allocation1 [shape = 'u32[144,128]{1,0:T(1,128)}', space=vmem, size = 0x12000, scoped, tag = 'internal scratch']
  #allocation2 [shape = 'f32[16,1]{1,0:T(8,128)}', space=vmem, size = 0x2000, scoped, tag = 'scratch operand']
  #allocation3 [shape = 'f32[16,1]{1,0:T(8,128)}', space=vmem, size = 0x2000, scoped, tag = 'scratch operand']
  %s0 = inlined_call_operand.vmem [shape: bf16[16,32], index: 0, kind: input, shape index: {}]
  %s1 = inlined_call_operand.vmem [shape: bf16[32,128], index: 1, kind: input, shape index: {}]
  %s2 = inlined_call_operand.vmem [shape: f32[1,128], index: 2, kind: input, shape index: {}]
  %s3 = inlined_call_operand.vmem [shape: f32[16,128], index: 3, kind: output, shape index: {0}]
  %s4 = inlined_call_operand.vmem [shape: f32[16,1], index: 4, kind: output, shape index: {1}]
  %5 = xla_tuple %s3, %s4
  %s6 = sld [smem:[#allocation0]]
  $region38: #{projection_layer.2} parent=0
    _
  %s8 = ssub.s32 1, %s6
  %s9 = scalar_select 0, %s8, %s6
  // Predicated region
  $region2: #{projection_layer.2} parent=0 // pred_check
    _
  $region3: #{projection_layer.2} parent=0 // pred_check_branch
    %11 = sbr.rel (0) target = $region5
  $region4: #{projection_layer.2} parent=0 // pred_region
    _
  $region5: #{projection_layer.2} parent=0 // pred_fallthru
    _
  // Predicated region
  $region6: #{projection_layer.2} parent=0 // pred_check
    _
  $region7: #{projection_layer.2} parent=0 // pred_check_branch
    %13 = sbr.rel (0) target = $region9
  $region8: #{projection_layer.2} parent=0 // pred_region
    _
  $region9: #{projection_layer.2} parent=0 // pred_fallthru
    _
  // Predicated region
  $region10: #{projection_layer.2} parent=0 // pred_check
    _
  $region11: #{projection_layer.2} parent=0 // pred_check_branch
    %15 = sbr.rel (0) target = $region13
  $region12: #{projection_layer.2} parent=0 // pred_region
    _
  $region13: #{projection_layer.2} parent=0 // pred_fallthru
    _
  %p17 = scmp.eq.s32.totalorder 0, 0
  // Predicated region
  $region14: #{projection_layer.2} parent=0 // pred_check
    %p18 = pneg %p17
  $region15: #{projection_layer.2} parent=0 // pred_check_branch
    %20 = sbr.rel (%p18) target = $region17
  $region16: #{projection_layer.2} parent=0 // pred_region
    %vm21 = vcmask 7168
    %22 = vst.msk [vmem:[#allocation2] sm:$0xff] %vm21, -inf
    %23 = vst.msk [vmem:[#allocation2 + $0x8] sm:$0xff] %vm21, -inf
    %24 = vst.msk [vmem:[#allocation3] sm:$0xff] %vm21, 0.0
    %25 = vst.msk [vmem:[#allocation3 + $0x8] sm:$0xff] %vm21, 0.0
  $region17: #{projection_layer.2} parent=0 // pred_fallthru
    _
  %v26 = vld [vmem:[%s0] sm:$0xf]
  %v27 = vld [vmem:[%s0 + $0x4] sm:$0xf]
  %v28 = vld [vmem:[%s1] sm:$0xf]
  %v29 = vld [vmem:[%s1 + $0x4] sm:$0xf]
  %v30 = vld [vmem:[%s1 + $0x8] sm:$0xf]
  %v31 = vld [vmem:[%s1 + $0xc] sm:$0xf]
  %v32 = vld [vmem:[%s2] sm:$0x1]
  %v34 = vlaneseq
  %v35 = vshrl.u32 %v34, 7
  %v36 = vsub.s32 0, %v35
  %v37 = vrot.slane %v32, %v36
  %v41 = vunpack.c.l.b16 %v26
  %v42 = vunpack.c.l.b16 %v27
  %v43 = vpack.c.b16 %v42, %v41
  %v48 = vunpack.c.l.b16 %v28
  %v49 = vunpack.c.l.b16 %v29
  %v50 = vunpack.c.l.b16 %v30
  %v51 = vunpack.c.l.b16 %v31
  %v52 = vpack.c.b16 %v49, %v48
  %v53 = vpack.c.b16 %v51, %v50
  %vm56 = vcmask 261120
  %v58 = vsel %vm56, %v43, 0
  %60 = vmatprep.subr.bf16.mxu0 0
  %61 = vmatpush1.bf16.msra.mxu0 %v52
  %62 = vmatprep.subr.bf16.mxu0 0
  %63 = vmatpush1.bf16.msra.mxu0 %v53
  %64 = vmatprep.subr.bf16.mxu0 0
  %65 = vmatpush1.bf16.msra.mxu0 0
  %66 = vmatprep.subr.bf16.mxu0 0
  %67 = vmatpush1.bf16.msra.mxu0 0
  %68 = vmatprep.subr.bf16.mxu0 0
  %69 = vmatpush1.bf16.msra.mxu0 0
  %70 = vmatprep.subr.bf16.mxu0 0
  %71 = vmatpush1.bf16.msra.mxu0 0
  %72 = vmatprep.subr.bf16.mxu0 0
  %73 = vmatpush1.bf16.msra.mxu0 0
  %74 = vmatprep.subr.bf16.mxu0 0
  %75 = vmatpush1.bf16.msra.mxu0 0
  %76 = vmatprep.subr.bf16.mxu0 0
  %77 = vmatpush1.bf16.msra.mxu0 0
  %78 = vmatprep.subr.bf16.mxu0 0
  %79 = vmatpush1.bf16.msra.mxu0 0
  %80 = vmatprep.subr.bf16.mxu0 0
  %81 = vmatpush1.bf16.msra.mxu0 0
  %82 = vmatprep.subr.bf16.mxu0 0
  %83 = vmatpush1.bf16.msra.mxu0 0
  %84 = vmatprep.subr.bf16.mxu0 0
  %85 = vmatpush1.bf16.msra.mxu0 0
  %86 = vmatprep.subr.bf16.mxu0 0
  %87 = vmatpush1.bf16.msra.mxu0 0
  %88 = vmatprep.subr.bf16.mxu0 0
  %89 = vmatpush1.bf16.msra.mxu0 0
  %90 = vmatprep.subr.bf16.mxu0 0
  %91 = vmatpush1.bf16.msra.mxu0 0
  %92 = vmatprep.mubr.bf16.mxu0 0
  %93 = vmatmul.mubr.bf16.gmra.mrb[0].mxu0 %v58
  %v94 = vpop.f32.mrb[0].mxu0
  %v95 = vadd.f32 %v37, %v94
  %v96 = vpop.f32.mrb[0].mxu0
  %v97 = vpop.f32.mrb[0].mxu0
  %v98 = vadd.f32 %v37, %v97
  %v99 = vpop.f32.mrb[0].mxu0
  %100 = vdwg.mxu0
  %101 = vst [vmem:[%s3] sm:$0xff] %v95
  %102 = vst [vmem:[%s3 + $0x8] sm:$0xff] %v98
  %v103 = vld [vmem:[#allocation2] sm:$0xff]
  %v104 = vld [vmem:[#allocation2 + $0x8] sm:$0xff]
  %105 = vmax.xlane.f32.xlu0 %v95
  %v106 = vpop.xlane.xlu0 %105
  %107 = vmax.xlane.f32.xlu0 %v98
  %v108 = vpop.xlane.xlu0 %107
  %v109 = vmax.f32 %v103, %v106
  %v110 = vmax.f32 %v104, %v108
  %v111 = vld [vmem:[#allocation3] sm:$0xff]
  %v112 = vld [vmem:[#allocation3 + $0x8] sm:$0xff]
  %v113 = vsub.f32 %v103, %v109
  %v114 = vsub.f32 %v104, %v110
  %v115 = vmul.f32 %v113, 1.442695
  %v116 = vpow.pop %v115
  %v117 = vmul.f32 %v114, 1.442695
  %v118 = vpow.pop %v117
  %v119 = vmul.f32 %v111, %v116
  %v120 = vmul.f32 %v112, %v118
  %122 = vset.pattern.permute.xlu0 0
  %123 = vperm.xlu0 %122, %v109
  %v124 = vpop.permute.xlu0 %123
  %127 = vset.pattern.permute.xlu0 0
  %128 = vperm.xlu0 %127, %v110
  %v129 = vpop.permute.xlu0 %128
  %v131 = vsub.f32 %v95, %v124
  %v132 = vsub.f32 %v98, %v129
  %v133 = vmul.f32 %v131, 1.442695
  %v134 = vpow.pop %v133
  %v135 = vmul.f32 %v132, 1.442695
  %v136 = vpow.pop %v135
  %137 = vadd.xlane.f32.xlu0 %v134
  %v138 = vpop.xlane.xlu0 %137
  %139 = vadd.xlane.f32.xlu0 %v136
  %v140 = vpop.xlane.xlu0 %139
  %v141 = vadd.f32 %v119, %v138
  %v142 = vadd.f32 %v120, %v140
  %vm143 = vcmask 7168
  %144 = vst.msk [vmem:[#allocation3] sm:$0xff] %vm143, %v141
  %145 = vst.msk [vmem:[#allocation3 + $0x8] sm:$0xff] %vm143, %v142
  %146 = vst.msk [vmem:[#allocation2] sm:$0xff] %vm143, %v109
  %147 = vst.msk [vmem:[#allocation2 + $0x8] sm:$0xff] %vm143, %v110
  // Predicated region
  $region18: #{projection_layer.2} parent=0 // pred_check
    %p148 = pneg %p17
  $region19: #{projection_layer.2} parent=0 // pred_check_branch
    %150 = sbr.rel (%p148) target = $region21
  $region20: #{projection_layer.2} parent=0 // pred_region
    %v151 = vld [vmem:[#allocation2] sm:$0xff]
    %v152 = vld [vmem:[#allocation2 + $0x8] sm:$0xff]
    %v153 = vld [vmem:[#allocation3] sm:$0xff]
    %v154 = vld [vmem:[#allocation3 + $0x8] sm:$0xff]
    %v155 = vlog2.pop %v153
    %v156 = vmul.f32 %v155, 0.6931472
    %v157 = vlog2.pop %v154
    %v158 = vmul.f32 %v157, 0.6931472
    %v159 = vadd.f32 %v151, %v156
    %v160 = vadd.f32 %v152, %v158
    %161 = vst.msk [vmem:[%s4] sm:$0xff] %vm143, %v159
    %162 = vst.msk [vmem:[%s4 + $0x8] sm:$0xff] %vm143, %v160
  $region21: #{projection_layer.2} parent=0 // pred_fallthru
    _
  // Predicated region
  $region22: #{projection_layer.2} parent=0 // pred_check
    _
  $region23: #{projection_layer.2} parent=0 // pred_check_branch
    %164 = sbr.rel (0) target = $region25
  $region24: #{projection_layer.2} parent=0 // pred_region
    _
  $region25: #{projection_layer.2} parent=0 // pred_fallthru
    _
  // Predicated region
  $region26: #{projection_layer.2} parent=0 // pred_check
    _
  $region27: #{projection_layer.2} parent=0 // pred_check_branch
    %166 = sbr.rel (0) target = $region29
  $region28: #{projection_layer.2} parent=0 // pred_region
    _
  $region29: #{projection_layer.2} parent=0 // pred_fallthru
    _
  // Predicated region
  $region30: #{projection_layer.2} parent=0 // pred_check
    _
  $region31: #{projection_layer.2} parent=0 // pred_check_branch
    %168 = sbr.rel (0) target = $region33
  $region32: #{projection_layer.2} parent=0 // pred_region
    _
  $region33: #{projection_layer.2} parent=0 // pred_fallthru
    _
  // Predicated region
  $region34: #{projection_layer.2} parent=0 // pred_check
    _
  $region35: #{projection_layer.2} parent=0 // pred_check_branch
    %170 = sbr.rel (0) target = $region37
  $region36: #{projection_layer.2} parent=0 // pred_region
    _
  $region37: #{projection_layer.2} parent=0 // pred_fallthru
    _

</llo_original>
